<compile_context>
chip_gen: v5e
topology: v5e:2x2
jax: 0.10.0
libtpu: 0.0.40
codegen_flags: <defaults>
</compile_context>

<pallas_src>
import functools

import jax
import jax.numpy as jnp
from jax.experimental import pallas as pl
from jax.experimental.pallas import tpu as pltpu

LANE = 128
SUBLANE_BF16 = 16


def _pad_to(x, rows, cols):
    r, c = x.shape
    return jnp.pad(x, ((0, rows - r), (0, cols - c)))


def _vmem_spec():
    # Whole-array blocks resident in VMEM (single grid point -> no pipelining,
    # hence no double-buffering of the dense adjacency).
    return pl.BlockSpec(memory_space=pltpu.MemorySpace.VMEM)


def _vmem_limit_bytes():
    # Derive the scoped-VMEM limit from hardware with ~25% headroom:
    # ~96 MiB on v5e/v6e (128 MiB physical), ~48 MiB on v7x (64 MiB per TC).
    try:
        cap = int(pltpu.get_tpu_info().vmem_capacity_bytes)
    except Exception:
        cap = 64 * 1024 * 1024  # conservative (v7x-sized) fallback
    return min(cap * 3 // 4, 112 * 1024 * 1024)


# ------------------------------ Fused kernel -------------------------------- #

def fused_mol_sage_kernel(*refs, n_conv, readout_relus):
    """Entire MolSAGE forward in one kernel.

    refs = (a, inv_deg, x, w_self, w_neigh, b_conv,
            w_read_0, b_read_0, ..., w_read_{R-1}, b_read_{R-1},
            out_0, ..., out_{R-1})

      a        : bf16 [Np, Np]       binary adjacency (exact 0/1, padded)
      inv_deg  : f32  [Np, 1]        1/degree (0 for isolated / padded rows)
      x        : f32  [Np, Fp]       node features (padded to 128 lanes)
      w_self   : bf16 [Lc, Fp, Fp]
      w_neigh  : bf16 [Lc, Fp, Fp]
      b_conv   : f32  [Lc, 1, Fp]
      w_read_r : bf16 [Lr, Fp, Fp]
      b_read_r : f32  [Lr, 1, Fp]
      out_r    : f32  [Np, Fp]       lane-dense outputs
    """
    n_read = len(readout_relus)
    a_ref, d_ref, x_ref, ws_ref, wn_ref, bc_ref = refs[:6]
    wr_refs = refs[6:6 + 2 * n_read:2]
    br_refs = refs[7:6 + 2 * n_read:2]
    out_refs = refs[6 + 2 * n_read:]

    a = a_ref[...]                            # bf16 [Np, Np], exact 0/1
    inv_deg = d_ref[...]                      # f32  [Np, 1]
    h_bf = x_ref[...].astype(jnp.bfloat16)    # single cast; consumers are all MXU bf16

    # --- GraphSAGE mean-aggregator stack (statically unrolled in-kernel) ---
    for l in range(n_conv):
        # Binary A @ H on the MXU, 1/deg scale as f32 VPU multiply (free under
        # MXU slack, keeps normalization exact).
        neigh = jnp.dot(a, h_bf, preferred_element_type=jnp.float32)
        neigh_bf = (neigh * inv_deg).astype(jnp.bfloat16)
        # Two dots into one f32 accumulator: no [Np, 2*Fp] concat buffer.
        acc = jnp.dot(h_bf, ws_ref[l], preferred_element_type=jnp.float32)
        acc = acc + jnp.dot(neigh_bf, wn_ref[l], preferred_element_type=jnp.float32)
        acc = acc + bc_ref[l]
        h_bf = jnp.maximum(acc, 0.0).astype(jnp.bfloat16)   # resident bf16 between layers

    # --- Pooling (PoolAtomFeatures == identity) + readout MLPs ---
    for r in range(n_read):
        y_bf = h_bf
        y = None
        wr_ref, br_ref = wr_refs[r], br_refs[r]
        relus = readout_relus[r]
        for li, relu in enumerate(relus):
            y = jnp.dot(y_bf, wr_ref[li], preferred_element_type=jnp.float32) + br_ref[li]
            if relu:
                y = jnp.maximum(y, 0.0)
            if li + 1 < len(relus):
                y_bf = y.astype(jnp.bfloat16)
        out_refs[r][...] = y                  # lane-dense [Np, 128] f32 store


# --------------------------- One-time weight packing ------------------------- #

def init_mol_sage(params):
    """Pad / pack all weights ONCE (not on the per-call path)."""
    f_pad = LANE
    conv = params["convolution"]
    ws = jnp.stack([_pad_to(l["w_self"], f_pad, f_pad) for l in conv]).astype(jnp.bfloat16)
    wn = jnp.stack([_pad_to(l["w_neigh"], f_pad, f_pad) for l in conv]).astype(jnp.bfloat16)
    bc = jnp.stack([_pad_to(l["b"], 1, f_pad) for l in conv]).astype(jnp.float32)

    packed = [ws, wn, bc]
    names, relus, widths = [], [], []
    for name, layers in params["readouts"].items():
        wr = jnp.stack([_pad_to(l["w"], f_pad, f_pad) for l in layers]).astype(jnp.bfloat16)
        br = jnp.stack([_pad_to(l["b"], 1, f_pad) for l in layers]).astype(jnp.float32)
        packed += [wr, br]
        names.append(name)
        relus.append(tuple(bool(l["relu"]) for l in layers))
        widths.append(int(layers[-1]["w"].shape[1]))

    meta = (len(conv), tuple(names), tuple(relus), tuple(widths))
    return meta, tuple(jax.device_put(p) for p in packed)


# ------------------------------- Forward wrapper ----------------------------- #

@functools.partial(jax.jit, static_argnums=0)
def _mol_sage_apply(meta, packed, adj, x):
    n_conv, names, readout_relus, out_widths = meta
    n = x.shape[0]
    n_pad = max(SUBLANE_BF16, ((n + SUBLANE_BF16 - 1) // SUBLANE_BF16) * SUBLANE_BF16)
    f_pad = LANE

    # Per-call graph preprocessing (cheap, fused by XLA): binary adjacency in
    # bf16 (exact) + f32 inverse degree for the mean aggregator.
    adj = adj.astype(jnp.float32)
    deg = jnp.sum(adj, axis=1, keepdims=True)
    inv_deg = jnp.where(deg > 0.0, 1.0 / deg, 0.0).astype(jnp.float32)

    a_p = _pad_to(adj, n_pad, n_pad).astype(jnp.bfloat16)
    d_p = _pad_to(inv_deg, n_pad, 1)
    x_p = _pad_to(x.astype(jnp.float32), n_pad, f_pad)

    operands = (a_p, d_p, x_p) + packed
    out_shapes = tuple(jax.ShapeDtypeStruct((n_pad, f_pad), jnp.float32) for _ in names)

    kernel = functools.partial(
        fused_mol_sage_kernel, n_conv=n_conv, readout_relus=readout_relus)

    outs = pl.pallas_call(
        kernel,
        out_shape=out_shapes,
        in_specs=[_vmem_spec()] * len(operands),
        out_specs=tuple(_vmem_spec() for _ in out_shapes),
        compiler_params=pltpu.CompilerParams(vmem_limit_bytes=_vmem_limit_bytes()),
    )(*operands)

    # Slice off row / lane padding (padded rows only ever hold ReLU(b) junk and
    # never feed back into real rows since A's padded columns are zero).
    # TODO(synk): postprocess layers (e.g. ComputePartialCharges) not implemented.
    return {name: outs[i][:n, :out_widths[i]] for i, name in enumerate(names)}


def mol_sage_forward(meta, packed, adj, x):
    return _mol_sage_apply(meta, packed, adj, x)


# ---------------------------- Pure-JAX reference ----------------------------- #

def mol_sage_reference(params, a_mean, x):
    h = x
    for layer in params["convolution"]:
        h = jnp.maximum(
            h @ layer["w_self"] + (a_mean @ h) @ layer["w_neigh"] + layer["b"], 0.0)
    outs = {}
    for name, layers in params["readouts"].items():
        y = h
        for l in layers:
            y = y @ l["w"] + l["b"]
            if l["relu"]:
                y = jnp.maximum(y, 0.0)
        outs[name] = y
    return outs


# ----------------------------------- main ------------------------------------ #

if __name__ == "__main__":
    key = jax.random.PRNGKey(0)

    # Small shapes consistent with the module.
    N = 8                                   # number of atoms (graph nodes)
    in_feats = 16                           # ConvolutionConfig.in_feats
    conv_hidden = [32, 32]                  # ConvolutionConfig.hidden_feats
    readout_hidden = {"charges": [32, 2]}   # ReadoutConfig.hidden_feats per readout

    k_adj, k_x, k_p = jax.random.split(key, 3)

    # Deterministic small molecular graph: symmetric binary adjacency, no self loops.
    adj = (jax.random.uniform(k_adj, (N, N)) < 0.4).astype(jnp.float32)
    adj = jnp.maximum(adj, adj.T) * (1.0 - jnp.eye(N, dtype=jnp.float32))
    deg = jnp.sum(adj, axis=1, keepdims=True)
    a_mean = (adj / jnp.maximum(deg, 1.0)).astype(jnp.float32)   # reference only

    x = jax.random.normal(k_x, (N, in_feats), dtype=jnp.float32)

    # Deterministic parameter initialization (shapes from __init__).
    params = {"convolution": [], "readouts": {}}
    keys = jax.random.split(k_p, 64)
    ki = 0

    f_in = in_feats
    for f_out in conv_hidden:
        scale = 1.0 / jnp.sqrt(jnp.float32(f_in))
        params["convolution"].append({
            "w_self": jax.random.normal(keys[ki], (f_in, f_out), dtype=jnp.float32) * scale,
            "w_neigh": jax.random.normal(keys[ki + 1], (f_in, f_out), dtype=jnp.float32) * scale,
            "b": jnp.zeros((1, f_out), dtype=jnp.float32),
        })
        ki += 2
        f_in = f_out

    for name, hidden in readout_hidden.items():
        layers = []
        # PoolAtomFeatures -> n_feature_columns() == 1.
        # TODO(synk): PoolBondFeatures (2 feature columns + bond MLP) not implemented.
        fi = conv_hidden[-1] * 1
        for li, fo in enumerate(hidden):
            scale = 1.0 / jnp.sqrt(jnp.float32(fi))
            layers.append({
                "w": jax.random.normal(keys[ki], (fi, fo), dtype=jnp.float32) * scale,
                "b": jnp.zeros((1, fo), dtype=jnp.float32),
                "relu": li < len(hidden) - 1,  # ReLU on hidden, identity on final
            })
            ki += 1
            fi = fo
        params["readouts"][name] = layers

    # One-time packing, then the jitted fused forward.
    meta, packed = init_mol_sage(params)
    out = mol_sage_forward(meta, packed, adj, x)
    out = jax.block_until_ready(out)

    # Shape sanity + loose tolerance check vs f32 reference (kernel uses bf16
    # MXU operands with f32 accumulation and exact mean normalization).
    assert out["charges"].shape == (N, readout_hidden["charges"][-1])
    ref = mol_sage_reference(params, a_mean, x)
    for name in ref:
        err = float(jnp.max(jnp.abs(out[name] - ref[name])))
        tol = float(5e-2 * (1.0 + jnp.max(jnp.abs(ref[name]))))
        assert err < tol, (name, err, tol)

    print("KERNEL_OK")
</pallas_src>

<mosaic_0001>
module attributes {stable_mosaic.version = 11 : i64} {
  func.func @fused_mol_sage_kernel(%arg0: memref<16x16xbf16, #tpu.memory_space<vmem>>, %arg1: memref<16x1xf32, #tpu.memory_space<vmem>>, %arg2: memref<16x128xf32, #tpu.memory_space<vmem>>, %arg3: memref<2x128x128xbf16, #tpu.memory_space<vmem>>, %arg4: memref<2x128x128xbf16, #tpu.memory_space<vmem>>, %arg5: memref<2x1x128xf32, #tpu.memory_space<vmem>>, %arg6: memref<2x128x128xbf16, #tpu.memory_space<vmem>>, %arg7: memref<2x1x128xf32, #tpu.memory_space<vmem>>, %arg8: memref<16x128xf32, #tpu.memory_space<vmem>>) attributes {dimension_semantics = [], scalar_prefetch = 0 : i64, scratch_operands = 0 : i64, tpu.core_type = #tpu.core_type<tc>} {
    %c0 = arith.constant 0 : index
    %c0_0 = arith.constant 0 : index
    %0 = vector.load %arg0[%c0, %c0_0] : memref<16x16xbf16, #tpu.memory_space<vmem>>, vector<16x16xbf16>
    %c0_1 = arith.constant 0 : index
    %c0_2 = arith.constant 0 : index
    %1 = vector.load %arg1[%c0_1, %c0_2] : memref<16x1xf32, #tpu.memory_space<vmem>>, vector<16x1xf32>
    %c0_3 = arith.constant 0 : index
    %c0_4 = arith.constant 0 : index
    %2 = vector.load %arg2[%c0_3, %c0_4] : memref<16x128xf32, #tpu.memory_space<vmem>>, vector<16x128xf32>
    %3 = arith.truncf %2 : vector<16x128xf32> to vector<16x128xbf16>
    %cst = arith.constant dense<0.000000e+00> : vector<16x128xf32>
    %4 = tpu.matmul %0, %3, %cst {dimension_numbers = #tpu.dot_dimension_numbers<[1], [0], [0], [1], [0, 0, 1, 1], [], []>} : vector<16x16xbf16>, vector<16x128xbf16>, vector<16x128xf32> -> vector<16x128xf32>
    %5 = vector.broadcast %1 : vector<16x1xf32> to vector<16x128xf32>
    %6 = arith.mulf %4, %5 : vector<16x128xf32>
    %7 = arith.truncf %6 : vector<16x128xf32> to vector<16x128xbf16>
    %c0_5 = arith.constant 0 : index
    %c0_6 = arith.constant 0 : index
    %c0_7 = arith.constant 0 : index
    %8 = vector.load %arg3[%c0_5, %c0_6, %c0_7] : memref<2x128x128xbf16, #tpu.memory_space<vmem>>, vector<1x128x128xbf16>
    %9 = vector.shape_cast %8 : vector<1x128x128xbf16> to vector<128x128xbf16>
    %cst_8 = arith.constant dense<0.000000e+00> : vector<16x128xf32>
    %10 = tpu.matmul %3, %9, %cst_8 {dimension_numbers = #tpu.dot_dimension_numbers<[1], [0], [0], [1], [0, 0, 1, 1], [], []>} : vector<16x128xbf16>, vector<128x128xbf16>, vector<16x128xf32> -> vector<16x128xf32>
    %c0_9 = arith.constant 0 : index
    %c0_10 = arith.constant 0 : index
    %c0_11 = arith.constant 0 : index
    %11 = vector.load %arg4[%c0_9, %c0_10, %c0_11] : memref<2x128x128xbf16, #tpu.memory_space<vmem>>, vector<1x128x128xbf16>
    %12 = vector.shape_cast %11 : vector<1x128x128xbf16> to vector<128x128xbf16>
    %cst_12 = arith.constant dense<0.000000e+00> : vector<16x128xf32>
    %13 = tpu.matmul %7, %12, %cst_12 {dimension_numbers = #tpu.dot_dimension_numbers<[1], [0], [0], [1], [0, 0, 1, 1], [], []>} : vector<16x128xbf16>, vector<128x128xbf16>, vector<16x128xf32> -> vector<16x128xf32>
    %14 = arith.addf %10, %13 : vector<16x128xf32>
    %c0_13 = arith.constant 0 : index
    %c0_14 = arith.constant 0 : index
    %c0_15 = arith.constant 0 : index
    %15 = vector.load %arg5[%c0_13, %c0_14, %c0_15] : memref<2x1x128xf32, #tpu.memory_space<vmem>>, vector<1x1x128xf32>
    %16 = vector.shape_cast %15 : vector<1x1x128xf32> to vector<1x128xf32>
    %17 = vector.broadcast %16 : vector<1x128xf32> to vector<16x128xf32>
    %18 = arith.addf %14, %17 : vector<16x128xf32>
    %cst_16 = arith.constant 0.000000e+00 : f32
    %19 = vector.broadcast %cst_16 : f32 to vector<16x128xf32>
    %20 = arith.maximumf %18, %19 : vector<16x128xf32>
    %21 = arith.truncf %20 : vector<16x128xf32> to vector<16x128xbf16>
    %cst_17 = arith.constant dense<0.000000e+00> : vector<16x128xf32>
    %22 = tpu.matmul %0, %21, %cst_17 {dimension_numbers = #tpu.dot_dimension_numbers<[1], [0], [0], [1], [0, 0, 1, 1], [], []>} : vector<16x16xbf16>, vector<16x128xbf16>, vector<16x128xf32> -> vector<16x128xf32>
    %23 = vector.broadcast %1 : vector<16x1xf32> to vector<16x128xf32>
    %24 = arith.mulf %22, %23 : vector<16x128xf32>
    %25 = arith.truncf %24 : vector<16x128xf32> to vector<16x128xbf16>
    %c1 = arith.constant 1 : index
    %c0_18 = arith.constant 0 : index
    %c0_19 = arith.constant 0 : index
    %26 = vector.load %arg3[%c1, %c0_18, %c0_19] : memref<2x128x128xbf16, #tpu.memory_space<vmem>>, vector<1x128x128xbf16>
    %27 = vector.shape_cast %26 : vector<1x128x128xbf16> to vector<128x128xbf16>
    %cst_20 = arith.constant dense<0.000000e+00> : vector<16x128xf32>
    %28 = tpu.matmul %21, %27, %cst_20 {dimension_numbers = #tpu.dot_dimension_numbers<[1], [0], [0], [1], [0, 0, 1, 1], [], []>} : vector<16x128xbf16>, vector<128x128xbf16>, vector<16x128xf32> -> vector<16x128xf32>
    %c1_21 = arith.constant 1 : index
    %c0_22 = arith.constant 0 : index
    %c0_23 = arith.constant 0 : index
    %29 = vector.load %arg4[%c1_21, %c0_22, %c0_23] : memref<2x128x128xbf16, #tpu.memory_space<vmem>>, vector<1x128x128xbf16>
    %30 = vector.shape_cast %29 : vector<1x128x128xbf16> to vector<128x128xbf16>
    %cst_24 = arith.constant dense<0.000000e+00> : vector<16x128xf32>
    %31 = tpu.matmul %25, %30, %cst_24 {dimension_numbers = #tpu.dot_dimension_numbers<[1], [0], [0], [1], [0, 0, 1, 1], [], []>} : vector<16x128xbf16>, vector<128x128xbf16>, vector<16x128xf32> -> vector<16x128xf32>
    %32 = arith.addf %28, %31 : vector<16x128xf32>
    %c1_25 = arith.constant 1 : index
    %c0_26 = arith.constant 0 : index
    %c0_27 = arith.constant 0 : index
    %33 = vector.load %arg5[%c1_25, %c0_26, %c0_27] : memref<2x1x128xf32, #tpu.memory_space<vmem>>, vector<1x1x128xf32>
    %34 = vector.shape_cast %33 : vector<1x1x128xf32> to vector<1x128xf32>
    %35 = vector.broadcast %34 : vector<1x128xf32> to vector<16x128xf32>
    %36 = arith.addf %32, %35 : vector<16x128xf32>
    %cst_28 = arith.constant 0.000000e+00 : f32
    %37 = vector.broadcast %cst_28 : f32 to vector<16x128xf32>
    %38 = arith.maximumf %36, %37 : vector<16x128xf32>
    %39 = arith.truncf %38 : vector<16x128xf32> to vector<16x128xbf16>
    %c0_29 = arith.constant 0 : index
    %c0_30 = arith.constant 0 : index
    %c0_31 = arith.constant 0 : index
    %40 = vector.load %arg6[%c0_29, %c0_30, %c0_31] : memref<2x128x128xbf16, #tpu.memory_space<vmem>>, vector<1x128x128xbf16>
    %41 = vector.shape_cast %40 : vector<1x128x128xbf16> to vector<128x128xbf16>
    %cst_32 = arith.constant dense<0.000000e+00> : vector<16x128xf32>
    %42 = tpu.matmul %39, %41, %cst_32 {dimension_numbers = #tpu.dot_dimension_numbers<[1], [0], [0], [1], [0, 0, 1, 1], [], []>} : vector<16x128xbf16>, vector<128x128xbf16>, vector<16x128xf32> -> vector<16x128xf32>
    %c0_33 = arith.constant 0 : index
    %c0_34 = arith.constant 0 : index
    %c0_35 = arith.constant 0 : index
    %43 = vector.load %arg7[%c0_33, %c0_34, %c0_35] : memref<2x1x128xf32, #tpu.memory_space<vmem>>, vector<1x1x128xf32>
    %44 = vector.shape_cast %43 : vector<1x1x128xf32> to vector<1x128xf32>
    %45 = vector.broadcast %44 : vector<1x128xf32> to vector<16x128xf32>
    %46 = arith.addf %42, %45 : vector<16x128xf32>
    %cst_36 = arith.constant 0.000000e+00 : f32
    %47 = vector.broadcast %cst_36 : f32 to vector<16x128xf32>
    %48 = arith.maximumf %46, %47 : vector<16x128xf32>
    %49 = arith.truncf %48 : vector<16x128xf32> to vector<16x128xbf16>
    %c1_37 = arith.constant 1 : index
    %c0_38 = arith.constant 0 : index
    %c0_39 = arith.constant 0 : index
    %50 = vector.load %arg6[%c1_37, %c0_38, %c0_39] : memref<2x128x128xbf16, #tpu.memory_space<vmem>>, vector<1x128x128xbf16>
    %51 = vector.shape_cast %50 : vector<1x128x128xbf16> to vector<128x128xbf16>
    %cst_40 = arith.constant dense<0.000000e+00> : vector<16x128xf32>
    %52 = tpu.matmul %49, %51, %cst_40 {dimension_numbers = #tpu.dot_dimension_numbers<[1], [0], [0], [1], [0, 0, 1, 1], [], []>} : vector<16x128xbf16>, vector<128x128xbf16>, vector<16x128xf32> -> vector<16x128xf32>
    %c1_41 = arith.constant 1 : index
    %c0_42 = arith.constant 0 : index
    %c0_43 = arith.constant 0 : index
    %53 = vector.load %arg7[%c1_41, %c0_42, %c0_43] : memref<2x1x128xf32, #tpu.memory_space<vmem>>, vector<1x1x128xf32>
    %54 = vector.shape_cast %53 : vector<1x1x128xf32> to vector<1x128xf32>
    %55 = vector.broadcast %54 : vector<1x128xf32> to vector<16x128xf32>
    %56 = arith.addf %52, %55 : vector<16x128xf32>
    %c0_44 = arith.constant 0 : index
    %c0_45 = arith.constant 0 : index
    %57 = vector.load %arg8[%c0_44, %c0_45] : memref<16x128xf32, #tpu.memory_space<vmem>>, vector<16x128xf32>
    tpu.vector_store %arg8[%c0_44, %c0_45], %56 {strides = array<i32>} : memref<16x128xf32, #tpu.memory_space<vmem>>, vector<16x128xf32>,
    return
  }
}

</mosaic_0001>

<llo_original>
// kernel: _mol_sage_apply.1
$region0: #{_mol_sage_apply.1}
  #allocation0 [shape = 'u32[]', space=smem, size = 0x4, offset = 0x4, fixed_abs, tag = 'smem constant byte address 0x4 - core index']
  #allocation1 [shape = 'u32[72,128]{1,0:T(1,128)}', space=vmem, size = 0x9000, scoped, tag = 'internal scratch']
  %s0 = inlined_call_operand.vmem [shape: bf16[16,16], index: 0, kind: input, shape index: {}]
  %s1 = inlined_call_operand.vmem [shape: f32[16,1], index: 1, kind: input, shape index: {}]
  %s2 = inlined_call_operand.vmem [shape: f32[16,128], index: 2, kind: input, shape index: {}]
  %s3 = inlined_call_operand.hbm [shape: bf16[2,128,128], index: 3, kind: input, shape index: {}]
  %s4 = inlined_call_operand.hbm [shape: bf16[2,128,128], index: 4, kind: input, shape index: {}]
  %s5 = inlined_call_operand.vmem [shape: f32[2,1,128], index: 5, kind: input, shape index: {}]
  %s6 = inlined_call_operand.hbm [shape: bf16[2,128,128], index: 6, kind: input, shape index: {}]
  %s7 = inlined_call_operand.vmem [shape: f32[2,1,128], index: 7, kind: input, shape index: {}]
  %s8 = inlined_call_operand.vmem [shape: f32[16,128], index: 8, kind: output, shape index: {}]
  %s9 = sld [smem:[#allocation0]]
  $region54: #{_mol_sage_apply.1} parent=0
    _
  %s11 = ssub.s32 1, %s9
  %s12 = scalar_select 0, %s11, %s9
  $region1: #{_mol_sage_apply.1} parent=0
    #allocation2 [shape = 'u8[65536]{0}', space=vmem, size = 0x10000, scoped, tag = 'input window, operand 3, single buffered']
    #allocation3 [shape = 's32[1]{0}', space=sflag, size = 0x4, scoped, tag = 'scoped memory for _mol_sage_apply.1']
    #allocation4 [shape = 'u8[65536]{0}', space=vmem, size = 0x10000, scoped, tag = 'input window, operand 4, single buffered']
    #allocation5 [shape = 's32[1]{0}', space=sflag, size = 0x4, scoped, tag = 'scoped memory for _mol_sage_apply.1']
    #allocation6 [shape = 'u8[65536]{0}', space=vmem, size = 0x10000, scoped, tag = 'input window, operand 6, single buffered']
    %13 = vsyncpa [#allocation3], 0
    %14 = vsyncpa [#allocation5], 0
    // Predicated region
    $region2: #{_mol_sage_apply.1} parent=1 // pred_check
      _
    $region3: #{_mol_sage_apply.1} parent=1 // pred_check_branch
      %16 = sbr.rel (0) target = $region5
    $region4: #{_mol_sage_apply.1} parent=1 // pred_region
      _
    $region5: #{_mol_sage_apply.1} parent=1 // pred_fallthru
      _
    // Predicated region
    $region6: #{_mol_sage_apply.1} parent=1 // pred_check
      _
    $region7: #{_mol_sage_apply.1} parent=1 // pred_check_branch
      %18 = sbr.rel (0) target = $region9
    $region8: #{_mol_sage_apply.1} parent=1 // pred_region
      _
    $region9: #{_mol_sage_apply.1} parent=1 // pred_fallthru
      _
    // Predicated region
    $region10: #{_mol_sage_apply.1} parent=1 // pred_check
      _
    $region11: #{_mol_sage_apply.1} parent=1 // pred_check_branch
      %20 = sbr.rel (0) target = $region13
    $region12: #{_mol_sage_apply.1} parent=1 // pred_region
      _
    $region13: #{_mol_sage_apply.1} parent=1 // pred_fallthru
      _
    // Predicated region
    $region14: #{_mol_sage_apply.1} parent=1 // pred_check
      _
    $region15: #{_mol_sage_apply.1} parent=1 // pred_check_branch
      %22 = sbr.rel (0) target = $region17
    $region16: #{_mol_sage_apply.1} parent=1 // pred_region
      %24 = vsyncadd [#allocation3], 0
      %s25 = sshll.u32 %s3, 4
      %s26 = int_to_ptr.hbm [resolvable:$true] %s25
      %s27 = sshll.u32 [#allocation2], 4
      %s28 = int_to_ptr.vmem [resolvable:$true] %s27
      %33 = dma.hbm_to_vmem [thread:$0]  %s26, 2048, %s28, [#allocation3], 64, 64, 4
    $region17: #{_mol_sage_apply.1} parent=1 // pred_fallthru
      _
    // Predicated region
    $region18: #{_mol_sage_apply.1} parent=1 // pred_check
      _
    $region19: #{_mol_sage_apply.1} parent=1 // pred_check_branch
      %35 = sbr.rel (0) target = $region21
    $region20: #{_mol_sage_apply.1} parent=1 // pred_region
      %37 = vsyncadd [#allocation5], 0
      %s38 = sshll.u32 %s4, 4
      %s39 = int_to_ptr.hbm [resolvable:$true] %s38
      %s40 = sshll.u32 [#allocation4], 4
      %s41 = int_to_ptr.vmem [resolvable:$true] %s40
      %46 = dma.hbm_to_vmem [thread:$0]  %s39, 2048, %s41, [#allocation5], 64, 64, 4
    $region21: #{_mol_sage_apply.1} parent=1 // pred_fallthru
      _
    // Predicated region
    $region22: #{_mol_sage_apply.1} parent=1 // pred_check
      _
    $region23: #{_mol_sage_apply.1} parent=1 // pred_check_branch
      %48 = sbr.rel (0) target = $region25
    $region24: #{_mol_sage_apply.1} parent=1 // pred_region
      _
    $region25: #{_mol_sage_apply.1} parent=1 // pred_fallthru
      _
    // Predicated region
    $region26: #{_mol_sage_apply.1} parent=1 // pred_check
      _
    $region27: #{_mol_sage_apply.1} parent=1 // pred_check_branch
      %50 = sbr.rel (0) target = $region29
    $region28: #{_mol_sage_apply.1} parent=1 // pred_region
      %52 = vsyncadd [#allocation5], 0
      %s53 = sshll.u32 %s6, 4
      %s54 = int_to_ptr.hbm [resolvable:$true] %s53
      %s55 = sshll.u32 [#allocation6], 4
      %s56 = int_to_ptr.vmem [resolvable:$true] %s55
      %61 = dma.hbm_to_vmem [thread:$0]  %s54, 2048, %s56, [#allocation5], 64, 64, 4
    $region29: #{_mol_sage_apply.1} parent=1 // pred_fallthru
      _
    // Predicated region
    $region30: #{_mol_sage_apply.1} parent=1 // pred_check
      _
    $region31: #{_mol_sage_apply.1} parent=1 // pred_check_branch
      %63 = sbr.rel (0) target = $region33
    $region32: #{_mol_sage_apply.1} parent=1 // pred_region
      _
    $region33: #{_mol_sage_apply.1} parent=1 // pred_fallthru
      _
    // Predicated region
    $region34: #{_mol_sage_apply.1} parent=1 // pred_check
      _
    $region35: #{_mol_sage_apply.1} parent=1 // pred_check_branch
      %65 = sbr.rel (0) target = $region37
    $region36: #{_mol_sage_apply.1} parent=1 // pred_region
      %67 = dma.done [#allocation3], 2048
    $region37: #{_mol_sage_apply.1} parent=1 // pred_fallthru
      _
    // Predicated region
    $region38: #{_mol_sage_apply.1} parent=1 // pred_check
      _
    $region39: #{_mol_sage_apply.1} parent=1 // pred_check_branch
      %69 = sbr.rel (0) target = $region41
    $region40: #{_mol_sage_apply.1} parent=1 // pred_region
      %71 = dma.done [#allocation5], 2048
    $region41: #{_mol_sage_apply.1} parent=1 // pred_fallthru
      _
    // Predicated region
    $region42: #{_mol_sage_apply.1} parent=1 // pred_check
      _
    $region43: #{_mol_sage_apply.1} parent=1 // pred_check_branch
      %73 = sbr.rel (0) target = $region45
    $region44: #{_mol_sage_apply.1} parent=1 // pred_region
      %75 = dma.done [#allocation5], 2048
    $region45: #{_mol_sage_apply.1} parent=1 // pred_fallthru
      _
    %v77 = vld [vmem:[%s0] sm:$0xf]
    %v78 = vld [vmem:[%s0 + $0x4] sm:$0xf]
    %v79 = vld [vmem:[%s1] sm:$0xff]
    %v80 = vld [vmem:[%s1 + $0x8] sm:$0xff]
    %v81 = vld [vmem:[%s2] sm:$0xff]
    %v82 = vld [vmem:[%s2 + $0x8] sm:$0xff]
    %v83 = vpack.c.bf16 %v82, %v81
    %v86 = vunpack.c.l.b16 %v77
    %v87 = vunpack.c.l.b16 %v78
    %v88 = vpack.c.b16 %v87, %v86
    %vm89 = vcmask 130048
    %v91 = vsel %vm89, %v88, 0
    %93 = vmatpush.bf16.msra.mxu0 0
    %94 = vmatpush.bf16.msra.mxu0 0
    %95 = vmatpush.bf16.msra.mxu0 0
    %96 = vmatpush.bf16.msra.mxu0 0
    %97 = vmatpush.bf16.msra.mxu0 0
    %98 = vmatpush.bf16.msra.mxu0 0
    %99 = vmatpush.bf16.msra.mxu0 0
    %100 = vmatpush.bf16.msra.mxu0 %v83
    %101 = vmatmul.bf16.gmra.mxu0 %v91
    %v102 = vpop.f32.mrf.mxu0
    %v103 = vadd.f32 0.0, %v102
    %v104 = vpop.f32.mrf.mxu0
    %v105 = vadd.f32 0.0, %v104
    %106 = vdwg.mxu0
    %108 = vset.pattern.permute.xlu0 0
    %109 = vperm.xlu0 %108, %v79
    %v110 = vpop.permute.xlu0 %109
    %113 = vset.pattern.permute.xlu0 0
    %114 = vperm.xlu0 %113, %v80
    %v115 = vpop.permute.xlu0 %114
    %v117 = vmul.f32 %v103, %v110
    %v118 = vmul.f32 %v105, %v115
    %v119 = vpack.c.bf16 %v118, %v117
    %v120 = vld [vmem:[#allocation2] sm:$0xf]
    %v121 = vld [vmem:[#allocation2 + $0x4] sm:$0xf]
    %v122 = vld [vmem:[#allocation2 + $0x8] sm:$0xf]
    %v123 = vld [vmem:[#allocation2 + $0xc] sm:$0xf]
    %v124 = vld [vmem:[#allocation2 + $0x10] sm:$0xf]
    %v125 = vld [vmem:[#allocation2 + $0x14] sm:$0xf]
    %v126 = vld [vmem:[#allocation2 + $0x18] sm:$0xf]
    %v127 = vld [vmem:[#allocation2 + $0x1c] sm:$0xf]
    %v128 = vld [vmem:[#allocation2 + $0x20] sm:$0xf]
    %v129 = vld [vmem:[#allocation2 + $0x24] sm:$0xf]
    %v130 = vld [vmem:[#allocation2 + $0x28] sm:$0xf]
    %v131 = vld [vmem:[#allocation2 + $0x2c] sm:$0xf]
    %v132 = vld [vmem:[#allocation2 + $0x30] sm:$0xf]
    %v133 = vld [vmem:[#allocation2 + $0x34] sm:$0xf]
    %v134 = vld [vmem:[#allocation2 + $0x38] sm:$0xf]
    %v135 = vld [vmem:[#allocation2 + $0x3c] sm:$0xf]
    %v136 = vld [vmem:[#allocation4] sm:$0xf]
    %v137 = vld [vmem:[#allocation4 + $0x4] sm:$0xf]
    %v138 = vld [vmem:[#allocation4 + $0x8] sm:$0xf]
    %v139 = vld [vmem:[#allocation4 + $0xc] sm:$0xf]
    %v140 = vld [vmem:[#allocation4 + $0x10] sm:$0xf]
    %v141 = vld [vmem:[#allocation4 + $0x14] sm:$0xf]
    %v142 = vld [vmem:[#allocation4 + $0x18] sm:$0xf]
    %v143 = vld [vmem:[#allocation4 + $0x1c] sm:$0xf]
    %v144 = vld [vmem:[#allocation4 + $0x20] sm:$0xf]
    %v145 = vld [vmem:[#allocation4 + $0x24] sm:$0xf]
    %v146 = vld [vmem:[#allocation4 + $0x28] sm:$0xf]
    %v147 = vld [vmem:[#allocation4 + $0x2c] sm:$0xf]
    %v148 = vld [vmem:[#allocation4 + $0x30] sm:$0xf]
    %v149 = vld [vmem:[#allocation4 + $0x34] sm:$0xf]
    %v150 = vld [vmem:[#allocation4 + $0x38] sm:$0xf]
    %v151 = vld [vmem:[#allocation4 + $0x3c] sm:$0xf]
    %v168 = vunpack.c.l.b16 %v136
    %v169 = vunpack.c.l.b16 %v137
    %v170 = vunpack.c.l.b16 %v138
    %v171 = vunpack.c.l.b16 %v139
    %v172 = vunpack.c.l.b16 %v140
    %v173 = vunpack.c.l.b16 %v141
    %v174 = vunpack.c.l.b16 %v142
    %v175 = vunpack.c.l.b16 %v143
    %v176 = vunpack.c.l.b16 %v144
    %v177 = vunpack.c.l.b16 %v145
    %v178 = vunpack.c.l.b16 %v146
    %v179 = vunpack.c.l.b16 %v147
    %v180 = vunpack.c.l.b16 %v148
    %v181 = vunpack.c.l.b16 %v149
    %v182 = vunpack.c.l.b16 %v150
    %v183 = vunpack.c.l.b16 %v151
    %v184 = vpack.c.b16 %v169, %v168
    %v185 = vpack.c.b16 %v171, %v170
    %v186 = vpack.c.b16 %v173, %v172
    %v187 = vpack.c.b16 %v175, %v174
    %v188 = vpack.c.b16 %v177, %v176
    %v189 = vpack.c.b16 %v179, %v178
    %v190 = vpack.c.b16 %v181, %v180
    %v191 = vpack.c.b16 %v183, %v182
    %200 = vmatpush.bf16.msra.mxu0 %v191
    %201 = vmatpush.bf16.msra.mxu0 %v190
    %202 = vmatpush.bf16.msra.mxu0 %v189
    %203 = vmatpush.bf16.msra.mxu0 %v188
    %204 = vmatpush.bf16.msra.mxu0 %v187
    %205 = vmatpush.bf16.msra.mxu0 %v186
    %206 = vmatpush.bf16.msra.mxu0 %v185
    %207 = vmatpush.bf16.msra.mxu0 %v184
    %208 = vmatmul.bf16.gmra.mxu0 %v119
    %v209 = vpop.f32.mrf.mxu0
    %v210 = vadd.f32 0.0, %v209
    %v211 = vpop.f32.mrf.mxu0
    %v212 = vadd.f32 0.0, %v211
    %213 = vdwg.mxu0
    %v230 = vunpack.c.l.b16 %v120
    %v231 = vunpack.c.l.b16 %v121
    %v232 = vunpack.c.l.b16 %v122
    %v233 = vunpack.c.l.b16 %v123
    %v234 = vunpack.c.l.b16 %v124
    %v235 = vunpack.c.l.b16 %v125
    %v236 = vunpack.c.l.b16 %v126
    %v237 = vunpack.c.l.b16 %v127
    %v238 = vunpack.c.l.b16 %v128
    %v239 = vunpack.c.l.b16 %v129
    %v240 = vunpack.c.l.b16 %v130
    %v241 = vunpack.c.l.b16 %v131
    %v242 = vunpack.c.l.b16 %v132
    %v243 = vunpack.c.l.b16 %v133
    %v244 = vunpack.c.l.b16 %v134
    %v245 = vunpack.c.l.b16 %v135
    %v246 = vpack.c.b16 %v231, %v230
    %v247 = vpack.c.b16 %v233, %v232
    %v248 = vpack.c.b16 %v235, %v234
    %v249 = vpack.c.b16 %v237, %v236
    %v250 = vpack.c.b16 %v239, %v238
    %v251 = vpack.c.b16 %v241, %v240
    %v252 = vpack.c.b16 %v243, %v242
    %v253 = vpack.c.b16 %v245, %v244
    %262 = vmatpush.bf16.msra.mxu0 %v253
    %263 = vmatpush.bf16.msra.mxu0 %v252
    %264 = vmatpush.bf16.msra.mxu0 %v251
    %265 = vmatpush.bf16.msra.mxu0 %v250
    %266 = vmatpush.bf16.msra.mxu0 %v249
    %267 = vmatpush.bf16.msra.mxu0 %v248
    %268 = vmatpush.bf16.msra.mxu0 %v247
    %269 = vmatpush.bf16.msra.mxu0 %v246
    %270 = vmatmul.bf16.gmra.mxu0 %v83
    %v271 = vpop.f32.mrf.mxu0
    %v272 = vadd.f32 %v210, %v271
    %v273 = vpop.f32.mrf.mxu0
    %v274 = vadd.f32 %v212, %v273
    %275 = vdwg.mxu0
    %v276 = vld [vmem:[%s5] sm:$0x1]
    %v278 = vperm.slane %v276, 0
    %v280 = vadd.f32 %v272, %v278
    %v281 = vadd.f32 %v274, %v278
    %v282 = vmax.f32 %v280, 0.0
    %v283 = vmax.f32 %v281, 0.0
    %v284 = vpack.c.bf16 %v283, %v282
    %285 = vmatpush.bf16.msra.mxu0 0
    %286 = vmatpush.bf16.msra.mxu0 0
    %287 = vmatpush.bf16.msra.mxu0 0
    %288 = vmatpush.bf16.msra.mxu0 0
    %289 = vmatpush.bf16.msra.mxu0 0
    %290 = vmatpush.bf16.msra.mxu0 0
    %291 = vmatpush.bf16.msra.mxu0 0
    %292 = vmatpush.bf16.msra.mxu0 %v284
    %293 = vmatmul.bf16.gmra.mxu0 %v91
    %v294 = vpop.f32.mrf.mxu0
    %v295 = vadd.f32 0.0, %v294
    %v296 = vpop.f32.mrf.mxu0
    %v297 = vadd.f32 0.0, %v296
    %298 = vdwg.mxu0
    %v299 = vmul.f32 %v295, %v110
    %v300 = vmul.f32 %v297, %v115
    %v301 = vpack.c.bf16 %v300, %v299
    %s302 = scalar_lea.vmem [#allocation2], 64
    %v303 = vld [vmem:[%s302] sm:$0xf]
    %v304 = vld [vmem:[%s302 + $0x4] sm:$0xf]
    %v305 = vld [vmem:[%s302 + $0x8] sm:$0xf]
    %v306 = vld [vmem:[%s302 + $0xc] sm:$0xf]
    %v307 = vld [vmem:[%s302 + $0x10] sm:$0xf]
    %v308 = vld [vmem:[%s302 + $0x14] sm:$0xf]
    %v309 = vld [vmem:[%s302 + $0x18] sm:$0xf]
    %v310 = vld [vmem:[%s302 + $0x1c] sm:$0xf]
    %v311 = vld [vmem:[%s302 + $0x20] sm:$0xf]
    %v312 = vld [vmem:[%s302 + $0x24] sm:$0xf]
    %v313 = vld [vmem:[%s302 + $0x28] sm:$0xf]
    %v314 = vld [vmem:[%s302 + $0x2c] sm:$0xf]
    %v315 = vld [vmem:[%s302 + $0x30] sm:$0xf]
    %v316 = vld [vmem:[%s302 + $0x34] sm:$0xf]
    %v317 = vld [vmem:[%s302 + $0x38] sm:$0xf]
    %v318 = vld [vmem:[%s302 + $0x3c] sm:$0xf]
    %s319 = scalar_lea.vmem [#allocation4], 64
    %v320 = vld [vmem:[%s319] sm:$0xf]
    %v321 = vld [vmem:[%s319 + $0x4] sm:$0xf]
    %v322 = vld [vmem:[%s319 + $0x8] sm:$0xf]
    %v323 = vld [vmem:[%s319 + $0xc] sm:$0xf]
    %v324 = vld [vmem:[%s319 + $0x10] sm:$0xf]
    %v325 = vld [vmem:[%s319 + $0x14] sm:$0xf]
    %v326 = vld [vmem:[%s319 + $0x18] sm:$0xf]
    %v327 = vld [vmem:[%s319 + $0x1c] sm:$0xf]
    %v328 = vld [vmem:[%s319 + $0x20] sm:$0xf]
    %v329 = vld [vmem:[%s319 + $0x24] sm:$0xf]
    %v330 = vld [vmem:[%s319 + $0x28] sm:$0xf]
    %v331 = vld [vmem:[%s319 + $0x2c] sm:$0xf]
    %v332 = vld [vmem:[%s319 + $0x30] sm:$0xf]
    %v333 = vld [vmem:[%s319 + $0x34] sm:$0xf]
    %v334 = vld [vmem:[%s319 + $0x38] sm:$0xf]
    %v335 = vld [vmem:[%s319 + $0x3c] sm:$0xf]
    %v352 = vunpack.c.l.b16 %v320
    %v353 = vunpack.c.l.b16 %v321
    %v354 = vunpack.c.l.b16 %v322
    %v355 = vunpack.c.l.b16 %v323
    %v356 = vunpack.c.l.b16 %v324
    %v357 = vunpack.c.l.b16 %v325
    %v358 = vunpack.c.l.b16 %v326
    %v359 = vunpack.c.l.b16 %v327
    %v360 = vunpack.c.l.b16 %v328
    %v361 = vunpack.c.l.b16 %v329
    %v362 = vunpack.c.l.b16 %v330
    %v363 = vunpack.c.l.b16 %v331
    %v364 = vunpack.c.l.b16 %v332
    %v365 = vunpack.c.l.b16 %v333
    %v366 = vunpack.c.l.b16 %v334
    %v367 = vunpack.c.l.b16 %v335
    %v368 = vpack.c.b16 %v353, %v352
    %v369 = vpack.c.b16 %v355, %v354
    %v370 = vpack.c.b16 %v357, %v356
    %v371 = vpack.c.b16 %v359, %v358
    %v372 = vpack.c.b16 %v361, %v360
    %v373 = vpack.c.b16 %v363, %v362
    %v374 = vpack.c.b16 %v365, %v364
    %v375 = vpack.c.b16 %v367, %v366
    %384 = vmatpush.bf16.msra.mxu0 %v375
    %385 = vmatpush.bf16.msra.mxu0 %v374
    %386 = vmatpush.bf16.msra.mxu0 %v373
    %387 = vmatpush.bf16.msra.mxu0 %v372
    %388 = vmatpush.bf16.msra.mxu0 %v371
    %389 = vmatpush.bf16.msra.mxu0 %v370
    %390 = vmatpush.bf16.msra.mxu0 %v369
    %391 = vmatpush.bf16.msra.mxu0 %v368
    %392 = vmatmul.bf16.gmra.mxu0 %v301
    %v393 = vpop.f32.mrf.mxu0
    %v394 = vadd.f32 0.0, %v393
    %v395 = vpop.f32.mrf.mxu0
    %v396 = vadd.f32 0.0, %v395
    %397 = vdwg.mxu0
    %v414 = vunpack.c.l.b16 %v303
    %v415 = vunpack.c.l.b16 %v304
    %v416 = vunpack.c.l.b16 %v305
    %v417 = vunpack.c.l.b16 %v306
    %v418 = vunpack.c.l.b16 %v307
    %v419 = vunpack.c.l.b16 %v308
    %v420 = vunpack.c.l.b16 %v309
    %v421 = vunpack.c.l.b16 %v310
    %v422 = vunpack.c.l.b16 %v311
    %v423 = vunpack.c.l.b16 %v312
    %v424 = vunpack.c.l.b16 %v313
    %v425 = vunpack.c.l.b16 %v314
    %v426 = vunpack.c.l.b16 %v315
    %v427 = vunpack.c.l.b16 %v316
    %v428 = vunpack.c.l.b16 %v317
    %v429 = vunpack.c.l.b16 %v318
    %v430 = vpack.c.b16 %v415, %v414
    %v431 = vpack.c.b16 %v417, %v416
    %v432 = vpack.c.b16 %v419, %v418
    %v433 = vpack.c.b16 %v421, %v420
    %v434 = vpack.c.b16 %v423, %v422
    %v435 = vpack.c.b16 %v425, %v424
    %v436 = vpack.c.b16 %v427, %v426
    %v437 = vpack.c.b16 %v429, %v428
    %446 = vmatpush.bf16.msra.mxu0 %v437
    %447 = vmatpush.bf16.msra.mxu0 %v436
    %448 = vmatpush.bf16.msra.mxu0 %v435
    %449 = vmatpush.bf16.msra.mxu0 %v434
    %450 = vmatpush.bf16.msra.mxu0 %v433
    %451 = vmatpush.bf16.msra.mxu0 %v432
    %452 = vmatpush.bf16.msra.mxu0 %v431
    %453 = vmatpush.bf16.msra.mxu0 %v430
    %454 = vmatmul.bf16.gmra.mxu0 %v284
    %v455 = vpop.f32.mrf.mxu0
    %v456 = vadd.f32 %v394, %v455
    %v457 = vpop.f32.mrf.mxu0
    %v458 = vadd.f32 %v396, %v457
    %459 = vdwg.mxu0
    %s460 = scalar_lea.vmem %s5, 1
    %v461 = vld [vmem:[%s460] sm:$0x1]
    %v463 = vperm.slane %v461, 0
    %v465 = vadd.f32 %v456, %v463
    %v466 = vadd.f32 %v458, %v463
    %v467 = vmax.f32 %v465, 0.0
    %v468 = vmax.f32 %v466, 0.0
    %v469 = vpack.c.bf16 %v468, %v467
    %v470 = vld [vmem:[#allocation6] sm:$0xf]
    %v471 = vld [vmem:[#allocation6 + $0x4] sm:$0xf]
    %v472 = vld [vmem:[#allocation6 + $0x8] sm:$0xf]
    %v473 = vld [vmem:[#allocation6 + $0xc] sm:$0xf]
    %v474 = vld [vmem:[#allocation6 + $0x10] sm:$0xf]
    %v475 = vld [vmem:[#allocation6 + $0x14] sm:$0xf]
    %v476 = vld [vmem:[#allocation6 + $0x18] sm:$0xf]
    %v477 = vld [vmem:[#allocation6 + $0x1c] sm:$0xf]
    %v478 = vld [vmem:[#allocation6 + $0x20] sm:$0xf]
    %v479 = vld [vmem:[#allocation6 + $0x24] sm:$0xf]
    %v480 = vld [vmem:[#allocation6 + $0x28] sm:$0xf]
    %v481 = vld [vmem:[#allocation6 + $0x2c] sm:$0xf]
    %v482 = vld [vmem:[#allocation6 + $0x30] sm:$0xf]
    %v483 = vld [vmem:[#allocation6 + $0x34] sm:$0xf]
    %v484 = vld [vmem:[#allocation6 + $0x38] sm:$0xf]
    %v485 = vld [vmem:[#allocation6 + $0x3c] sm:$0xf]
    %v486 = vld [vmem:[%s7] sm:$0x1]
    %v488 = vperm.slane %v486, 0
    %v506 = vunpack.c.l.b16 %v470
    %v507 = vunpack.c.l.b16 %v471
    %v508 = vunpack.c.l.b16 %v472
    %v509 = vunpack.c.l.b16 %v473
    %v510 = vunpack.c.l.b16 %v474
    %v511 = vunpack.c.l.b16 %v475
    %v512 = vunpack.c.l.b16 %v476
    %v513 = vunpack.c.l.b16 %v477
    %v514 = vunpack.c.l.b16 %v478
    %v515 = vunpack.c.l.b16 %v479
    %v516 = vunpack.c.l.b16 %v480
    %v517 = vunpack.c.l.b16 %v481
    %v518 = vunpack.c.l.b16 %v482
    %v519 = vunpack.c.l.b16 %v483
    %v520 = vunpack.c.l.b16 %v484
    %v521 = vunpack.c.l.b16 %v485
    %v522 = vpack.c.b16 %v507, %v506
    %v523 = vpack.c.b16 %v509, %v508
    %v524 = vpack.c.b16 %v511, %v510
    %v525 = vpack.c.b16 %v513, %v512
    %v526 = vpack.c.b16 %v515, %v514
    %v527 = vpack.c.b16 %v517, %v516
    %v528 = vpack.c.b16 %v519, %v518
    %v529 = vpack.c.b16 %v521, %v520
    %538 = vmatpush.bf16.msra.mxu0 %v529
    %539 = vmatpush.bf16.msra.mxu0 %v528
    %540 = vmatpush.bf16.msra.mxu0 %v527
    %541 = vmatpush.bf16.msra.mxu0 %v526
    %542 = vmatpush.bf16.msra.mxu0 %v525
    %543 = vmatpush.bf16.msra.mxu0 %v524
    %544 = vmatpush.bf16.msra.mxu0 %v523
    %545 = vmatpush.bf16.msra.mxu0 %v522
    %546 = vmatmul.bf16.gmra.mxu0 %v469
    %v547 = vpop.f32.mrf.mxu0
    %v548 = vadd.f32 %v488, %v547
    %v549 = vpop.f32.mrf.mxu0
    %v550 = vadd.f32 %v488, %v549
    %551 = vdwg.mxu0
    %v552 = vmax.f32 %v548, 0.0
    %v553 = vmax.f32 %v550, 0.0
    %v554 = vpack.c.bf16 %v553, %v552
    %s555 = scalar_lea.vmem [#allocation6], 64
    %v556 = vld [vmem:[%s555] sm:$0xf]
    %v557 = vld [vmem:[%s555 + $0x4] sm:$0xf]
    %v558 = vld [vmem:[%s555 + $0x8] sm:$0xf]
    %v559 = vld [vmem:[%s555 + $0xc] sm:$0xf]
    %v560 = vld [vmem:[%s555 + $0x10] sm:$0xf]
    %v561 = vld [vmem:[%s555 + $0x14] sm:$0xf]
    %v562 = vld [vmem:[%s555 + $0x18] sm:$0xf]
    %v563 = vld [vmem:[%s555 + $0x1c] sm:$0xf]
    %v564 = vld [vmem:[%s555 + $0x20] sm:$0xf]
    %v565 = vld [vmem:[%s555 + $0x24] sm:$0xf]
    %v566 = vld [vmem:[%s555 + $0x28] sm:$0xf]
    %v567 = vld [vmem:[%s555 + $0x2c] sm:$0xf]
    %v568 = vld [vmem:[%s555 + $0x30] sm:$0xf]
    %v569 = vld [vmem:[%s555 + $0x34] sm:$0xf]
    %v570 = vld [vmem:[%s555 + $0x38] sm:$0xf]
    %v571 = vld [vmem:[%s555 + $0x3c] sm:$0xf]
    %s572 = scalar_lea.vmem %s7, 1
    %v573 = vld [vmem:[%s572] sm:$0x1]
    %v575 = vperm.slane %v573, 0
    %v593 = vunpack.c.l.b16 %v556
    %v594 = vunpack.c.l.b16 %v557
    %v595 = vunpack.c.l.b16 %v558
    %v596 = vunpack.c.l.b16 %v559
    %v597 = vunpack.c.l.b16 %v560
    %v598 = vunpack.c.l.b16 %v561
    %v599 = vunpack.c.l.b16 %v562
    %v600 = vunpack.c.l.b16 %v563
    %v601 = vunpack.c.l.b16 %v564
    %v602 = vunpack.c.l.b16 %v565
    %v603 = vunpack.c.l.b16 %v566
    %v604 = vunpack.c.l.b16 %v567
    %v605 = vunpack.c.l.b16 %v568
    %v606 = vunpack.c.l.b16 %v569
    %v607 = vunpack.c.l.b16 %v570
    %v608 = vunpack.c.l.b16 %v571
    %v609 = vpack.c.b16 %v594, %v593
    %v610 = vpack.c.b16 %v596, %v595
    %v611 = vpack.c.b16 %v598, %v597
    %v612 = vpack.c.b16 %v600, %v599
    %v613 = vpack.c.b16 %v602, %v601
    %v614 = vpack.c.b16 %v604, %v603
    %v615 = vpack.c.b16 %v606, %v605
    %v616 = vpack.c.b16 %v608, %v607
    %625 = vmatpush.bf16.msra.mxu0 %v616
    %626 = vmatpush.bf16.msra.mxu0 %v615
    %627 = vmatpush.bf16.msra.mxu0 %v614
    %628 = vmatpush.bf16.msra.mxu0 %v613
    %629 = vmatpush.bf16.msra.mxu0 %v612
    %630 = vmatpush.bf16.msra.mxu0 %v611
    %631 = vmatpush.bf16.msra.mxu0 %v610
    %632 = vmatpush.bf16.msra.mxu0 %v609
    %633 = vmatmul.bf16.gmra.mxu0 %v554
    %v634 = vpop.f32.mrf.mxu0
    %v635 = vadd.f32 %v575, %v634
    %v636 = vpop.f32.mrf.mxu0
    %v637 = vadd.f32 %v575, %v636
    %638 = vdwg.mxu0
    %639 = vst [vmem:[%s8] sm:$0xff] %v635
    %640 = vst [vmem:[%s8 + $0x8] sm:$0xff] %v637
    // Predicated region
    $region46: #{_mol_sage_apply.1} parent=1 // pred_check
      _
    $region47: #{_mol_sage_apply.1} parent=1 // pred_check_branch
      %642 = sbr.rel (0) target = $region49
    $region48: #{_mol_sage_apply.1} parent=1 // pred_region
      _
    $region49: #{_mol_sage_apply.1} parent=1 // pred_fallthru
      _
    // Predicated region
    $region50: #{_mol_sage_apply.1} parent=1 // pred_check
      _
    $region51: #{_mol_sage_apply.1} parent=1 // pred_check_branch
      %644 = sbr.rel (0) target = $region53
    $region52: #{_mol_sage_apply.1} parent=1 // pred_region
      _
    $region53: #{_mol_sage_apply.1} parent=1 // pred_fallthru
      _
    %645 = vsyncpa [#allocation3], 1
    %646 = vsyncpa [#allocation5], 1

</llo_original>
